<compile_context>
chip_gen: v7x
topology: tpu7x:2x2x1
jax: 0.10.0
libtpu: 0.0.40
codegen_flags: <defaults>
</compile_context>

<pallas_src>
import functools

import jax
import jax.numpy as jnp
from jax.experimental import pallas as pl
from jax.experimental.pallas import tpu as pltpu


def _scaler_kernel(data_ref, obs_ref, scaled_ref, scale_ref, *,
                   time_axis, minimum_scale):
    # data_ref/obs_ref/scaled_ref: (NB, T, C) block (time_first) or (NB, C, T)
    # scale_ref: lane-dense 2-D (NB, C) block
    data = data_ref[...].astype(jnp.float32)

    obs_raw = obs_ref[...]
    if obs_raw.dtype == jnp.bool_:
        observed = obs_raw
    else:
        observed = obs_raw != 0          # predicate only; no f32 mask copy

    # Masked |data| and observed-count, reduced over the time axis.
    num = jnp.sum(jnp.where(observed, jnp.abs(data), 0.0), axis=time_axis)
    den = jnp.sum(jnp.where(observed, 1.0, 0.0), axis=time_axis)    # (NB, C)

    scale = num / jnp.maximum(den, 1.0)
    # Series with no observed points get scale 1.0 (avoids div-by-zero).
    scale = jnp.where(den > 0.0, scale, jnp.ones_like(scale))
    if minimum_scale > 0.0:
        scale = jnp.maximum(scale, jnp.float32(minimum_scale))

    # Exact reciprocal on the tiny (NB, C) tensor (EUP slot); the per-element
    # work below is then a single multiply instead of a broadcast f32 divide.
    # Intentional deviation: data * (1/scale) may differ from data / scale by
    # ~1 ulp per element.
    inv = pl.reciprocal(scale, approx=False)

    scale_ref[...] = scale.astype(scale_ref.dtype)
    inv_b = jnp.expand_dims(inv, time_axis)              # (NB,1,C) / (NB,C,1)
    scaled_ref[...] = (data * inv_b).astype(scaled_ref.dtype)


def _vmem_budget():
    """(target data-block bytes, vmem_limit_bytes) per TPU generation."""
    cap = None
    try:
        info = pltpu.get_tpu_info()
        cap = getattr(info, "vmem_capacity_bytes", None)
    except Exception:
        cap = None
    if cap is None:
        cap = 64 << 20                    # conservative (v7x-class) fallback
    cap = int(cap)
    if cap <= (64 << 20):
        # v7x-class: 64 MiB VMEM/TC but very fast HBM -> 4 MiB blocks, 48 MiB cap.
        return (4 << 20, 48 << 20)
    # v5e / v6e: 128 MiB physical VMEM; raise the scoped limit to fit 8 MiB blocks.
    return (8 << 20, 96 << 20)


def _choose_block_batch(n, row_bytes, sublane, target_bytes):
    """Pick how many series to process per grid step.

    Targets ~`target_bytes` of data per block, keeps the block-batch a
    multiple of the dtype's sublane packing (unless it spans the whole batch),
    and prefers >= 2 (even) grid steps so dual-TensorCore parts can shard the
    single "parallel" batch axis.
    """
    if n <= sublane:
        return n
    total = n * max(int(row_bytes), 1)
    steps = max(1, -(-total // max(int(target_bytes), 1)))
    if steps == 1 and n >= 2 * sublane:
        steps = 2                          # give both TCs something to do
    if steps > 1 and steps % 2:
        steps += 1                         # prefer an even step count
    nb = -(-n // steps)
    nb = -(-nb // sublane) * sublane       # round up to a sublane multiple
    return min(nb, n)


def scaler_forward(data, observed_indicator, *, keepdim=False, time_first=True,
                   block_batch=None, minimum_scale=0.0):
    """Pallas implementation of Scaler.forward (MeanScaler-style scale).

    Returns (scaled_data, scale) with the same shape conventions as the
    PyTorch module: scale has shape (N, C) if keepdim == False, otherwise
    (N, 1, C) (time_first) or (N, C, 1) (not time_first).

    `observed_indicator` may be any dtype; bool / int8 is recommended (the
    kernel is HBM-bandwidth bound, so a 1-byte mask is ~25% less traffic than
    f32). Set `minimum_scale > 0` to clamp the scale (GluonTS MeanScaler
    behaviour); the default 0.0 matches the plain formula.
    """
    assert data.ndim == 3 and data.shape == observed_indicator.shape
    N = data.shape[0]
    time_axis = 1 if time_first else 2
    C = data.shape[2] if time_first else data.shape[1]
    T = data.shape[time_axis]

    target_bytes, vmem_limit = _vmem_budget()
    sublane = max(8, 32 // data.dtype.itemsize)     # 8 f32 / 16 bf16 / 32 int8
    row_bytes = T * C * data.dtype.itemsize

    if block_batch is not None:
        nb = min(int(block_batch), N)
    else:
        nb = _choose_block_batch(N, row_bytes, sublane, target_bytes)
    grid = (pl.cdiv(N, nb),)

    data_block = (nb,) + data.shape[1:]   # full (T, C) / (C, T) per block
    scale_block = (nb, C)                 # lane-dense scale output

    kernel = functools.partial(_scaler_kernel, time_axis=time_axis,
                               minimum_scale=float(minimum_scale))

    elems = data.size
    cost = pl.CostEstimate(
        flops=5 * elems,
        transcendentals=0,
        bytes_accessed=(2 * data.nbytes
                        + observed_indicator.nbytes
                        + N * C * data.dtype.itemsize),
    )

    scaled, scale = pl.pallas_call(
        kernel,
        out_shape=(
            jax.ShapeDtypeStruct(data.shape, data.dtype),
            jax.ShapeDtypeStruct((N, C), data.dtype),
        ),
        grid=grid,
        in_specs=[
            pl.BlockSpec(data_block, lambda n: (n, 0, 0)),
            pl.BlockSpec(data_block, lambda n: (n, 0, 0)),
        ],
        out_specs=(
            pl.BlockSpec(data_block, lambda n: (n, 0, 0)),
            pl.BlockSpec(scale_block, lambda n: (n, 0)),
        ),
        compiler_params=pltpu.CompilerParams(
            dimension_semantics=("parallel",),
            vmem_limit_bytes=int(vmem_limit),
        ),
        cost_estimate=cost,
    )(data, observed_indicator)

    if keepdim:
        return scaled, jnp.expand_dims(scale, axis=time_axis)
    return scaled, scale


def _reference(data, observed_indicator, *, keepdim=False, time_first=True):
    obs = observed_indicator.astype(jnp.float32)
    d = data.astype(jnp.float32)
    axis = 1 if time_first else 2
    num = jnp.sum(jnp.abs(d) * obs, axis=axis)
    den = jnp.sum(obs, axis=axis)
    scale = num / jnp.maximum(den, 1.0)
    scale = jnp.where(den > 0.0, scale, jnp.ones_like(scale))
    scale_b = jnp.expand_dims(scale, axis)
    scaled = (d / scale_b).astype(data.dtype)
    if keepdim:
        return scaled, scale_b.astype(data.dtype)
    return scaled, scale.astype(data.dtype)


if __name__ == "__main__":
    key = jax.random.PRNGKey(0)
    k_d1, k_o1, k_d2, k_o2 = jax.random.split(key, 4)

    # Case 1: time_first=True, keepdim=False, bool mask (recommended low-traffic path).
    N, T, C = 2, 8, 32
    data1 = jax.random.normal(k_d1, (N, T, C), dtype=jnp.float32)
    obs1 = jax.random.uniform(k_o1, (N, T, C)) > 0.3            # bool mask

    scaled1, scale1 = scaler_forward(data1, obs1, keepdim=False, time_first=True)
    jax.block_until_ready((scaled1, scale1))
    ref_scaled1, ref_scale1 = _reference(data1, obs1, keepdim=False, time_first=True)
    assert scaled1.shape == (N, T, C) and scale1.shape == (N, C)
    assert jnp.allclose(scaled1, ref_scaled1, atol=1e-5, rtol=1e-5)
    assert jnp.allclose(scale1, ref_scale1, atol=1e-5, rtol=1e-5)

    # Case 2: time_first=False, keepdim=True, int8 mask; auto block sizing picks
    # an even batch grid (N=17 -> nb=16 -> 2 steps, partial last block).
    N2, C2, T2 = 17, 16, 128
    data2 = jax.random.normal(k_d2, (N2, C2, T2), dtype=jnp.float32)
    obs2 = (jax.random.uniform(k_o2, (N2, C2, T2)) > 0.5).astype(jnp.int8)

    scaled2, scale2 = scaler_forward(data2, obs2, keepdim=True, time_first=False)
    jax.block_until_ready((scaled2, scale2))
    ref_scaled2, ref_scale2 = _reference(data2, obs2, keepdim=True, time_first=False)
    assert scaled2.shape == (N2, C2, T2) and scale2.shape == (N2, C2, 1)
    assert jnp.allclose(scaled2, ref_scaled2, atol=1e-5, rtol=1e-5)
    assert jnp.allclose(scale2, ref_scale2, atol=1e-5, rtol=1e-5)

    print("KERNEL_OK")
</pallas_src>

<mosaic_0001>
module attributes {stable_mosaic.version = 11 : i64} {
  func.func @_scaler_kernel(%arg0: i32, %arg1: memref<2x8x32xf32, #tpu.memory_space<vmem>>, %arg2: memref<2x8x32xi32, #tpu.memory_space<vmem>>, %arg3: memref<2x8x32xf32, #tpu.memory_space<vmem>>, %arg4: memref<2x32xf32, #tpu.memory_space<vmem>>) attributes {dimension_semantics = [#tpu.dimension_semantics<parallel>], iteration_bounds = array<i64: 1>, scalar_prefetch = 0 : i64, scratch_operands = 0 : i64, tpu.core_type = #tpu.core_type<tc>, window_params = [{transform_indices = @transform_0, window_bounds = array<i64: 2, 8, 32>}, {transform_indices = @transform_1, window_bounds = array<i64: 2, 8, 32>}, {transform_indices = @transform_2, window_bounds = array<i64: 2, 8, 32>}, {transform_indices = @transform_3, window_bounds = array<i64: 2, 32>}]} {
    %c0 = arith.constant 0 : index
    %c0_0 = arith.constant 0 : index
    %c0_1 = arith.constant 0 : index
    %0 = vector.load %arg1[%c0, %c0_0, %c0_1] : memref<2x8x32xf32, #tpu.memory_space<vmem>>, vector<2x8x32xf32>
    %c0_2 = arith.constant 0 : index
    %c0_3 = arith.constant 0 : index
    %c0_4 = arith.constant 0 : index
    %1 = vector.load %arg2[%c0_2, %c0_3, %c0_4] : memref<2x8x32xi32, #tpu.memory_space<vmem>>, vector<2x8x32xi32>
    %cst = arith.constant dense<0> : vector<2x8x32xi32>
    %2 = arith.cmpi ne, %1, %cst : vector<2x8x32xi32>
    %3 = math.absf %0 : vector<2x8x32xf32>
    %cst_5 = arith.constant 0.000000e+00 : f32
    %4 = vector.broadcast %cst_5 : f32 to vector<2x8x32xf32>
    %5 = arith.select %2, %3, %4 : vector<2x8x32xi1>, vector<2x8x32xf32>
    %cst_6 = arith.constant dense<0.000000e+00> : vector<2x32xf32>
    %6 = vector.multi_reduction <add>, %5, %cst_6 [1] : vector<2x8x32xf32> to vector<2x32xf32>
    %cst_7 = arith.constant 1.000000e+00 : f32
    %cst_8 = arith.constant 0.000000e+00 : f32
    %7 = vector.broadcast %cst_7 : f32 to vector<2x8x32xf32>
    %8 = vector.broadcast %cst_8 : f32 to vector<2x8x32xf32>
    %9 = arith.select %2, %7, %8 : vector<2x8x32xi1>, vector<2x8x32xf32>
    %cst_9 = arith.constant dense<0.000000e+00> : vector<2x32xf32>
    %10 = vector.multi_reduction <add>, %9, %cst_9 [1] : vector<2x8x32xf32> to vector<2x32xf32>
    %cst_10 = arith.constant 1.000000e+00 : f32
    %11 = vector.broadcast %cst_10 : f32 to vector<2x32xf32>
    %12 = arith.maximumf %10, %11 : vector<2x32xf32>
    %13 = arith.divf %6, %12 : vector<2x32xf32>
    %cst_11 = arith.constant 0.000000e+00 : f32
    %14 = vector.broadcast %cst_11 : f32 to vector<2x32xf32>
    %15 = arith.cmpf ogt, %10, %14 : vector<2x32xf32>
    %cst_12 = arith.constant 1.000000e+00 : f32
    %16 = vector.broadcast %cst_12 : f32 to vector<2x32xf32>
    %17 = arith.select %15, %13, %16 : vector<2x32xi1>, vector<2x32xf32>
    %18 = tpu.reciprocal %17 : vector<2x32xf32> -> vector<2x32xf32>
    %c0_13 = arith.constant 0 : index
    %c0_14 = arith.constant 0 : index
    %19 = vector.load %arg4[%c0_13, %c0_14] : memref<2x32xf32, #tpu.memory_space<vmem>>, vector<2x32xf32>
    tpu.vector_store %arg4[%c0_13, %c0_14], %17 {strides = array<i32>} : memref<2x32xf32, #tpu.memory_space<vmem>>, vector<2x32xf32>,
    %20 = vector.shape_cast %18 : vector<2x32xf32> to vector<2x1x32xf32>
    %21 = vector.broadcast %20 : vector<2x1x32xf32> to vector<2x8x32xf32>
    %22 = arith.mulf %0, %21 : vector<2x8x32xf32>
    %c0_15 = arith.constant 0 : index
    %c0_16 = arith.constant 0 : index
    %c0_17 = arith.constant 0 : index
    %23 = vector.load %arg3[%c0_15, %c0_16, %c0_17] : memref<2x8x32xf32, #tpu.memory_space<vmem>>, vector<2x8x32xf32>
    tpu.vector_store %arg3[%c0_15, %c0_16, %c0_17], %22 {strides = array<i32>} : memref<2x8x32xf32, #tpu.memory_space<vmem>>, vector<2x8x32xf32>,
    return
  }
  func.func @transform_0(%arg0: i32) -> (i32, i32, i32) {
    %c0_i32 = arith.constant 0 : i32
    %c0_i32_0 = arith.constant 0 : i32
    %c0_i32_1 = arith.constant 0 : i32
    return %arg0, %c0_i32, %c0_i32_0 : i32, i32, i32
  }
  func.func @transform_1(%arg0: i32) -> (i32, i32, i32) {
    %c0_i32 = arith.constant 0 : i32
    %c0_i32_0 = arith.constant 0 : i32
    %c0_i32_1 = arith.constant 0 : i32
    return %arg0, %c0_i32, %c0_i32_0 : i32, i32, i32
  }
  func.func @transform_2(%arg0: i32) -> (i32, i32, i32) {
    %c0_i32 = arith.constant 0 : i32
    %c0_i32_0 = arith.constant 0 : i32
    %c0_i32_1 = arith.constant 0 : i32
    return %arg0, %c0_i32, %c0_i32_0 : i32, i32, i32
  }
  func.func @transform_3(%arg0: i32) -> (i32, i32) {
    %c0_i32 = arith.constant 0 : i32
    %c0_i32_0 = arith.constant 0 : i32
    return %arg0, %c0_i32 : i32, i32
  }
}

</mosaic_0001>

<llo_original>
// kernel: tpu_custom_call.1
$region0: #{tpu_custom_call.1}
  #allocation0 [shape = 'u32[]', space=smem, size = 0x4, offset = 0x4, fixed_abs, tag = 'smem constant byte address 0x4 - core index']
  #allocation1 [shape = 'u32[144,128]{1,0:T(1,128)}', space=vmem, size = 0x12000, scoped, tag = 'internal scratch']
  %s0 = inlined_call_operand.vmem [shape: f32[2,8,32], index: 0, kind: input, shape index: {}]
  %s1 = inlined_call_operand.vmem [shape: s32[2,8,32], index: 1, kind: input, shape index: {}]
  %s2 = inlined_call_operand.hbm [shape: f32[2,8,32], index: 2, kind: output, shape index: {0}]
  %s3 = inlined_call_operand.hbm [shape: f32[2,32], index: 3, kind: output, shape index: {1}]
  %4 = xla_tuple %s2, %s3
  %s5 = sld [smem:[#allocation0]]
  $region26: #{tpu_custom_call.1} parent=0
    _
  %s7 = ssub.s32 1, %s5
  %s8 = scalar_select 0, %s7, %s5
  $region1: #{tpu_custom_call.1} parent=0
    #allocation2 [shape = 'u8[8192]{0}', space=vmem, size = 0x2000, scoped, tag = 'output window, operand 0, single buffered']
    #allocation3 [shape = 's32[1]{0}', space=sflag, size = 0x4, scoped, tag = 'scoped memory for tpu_custom_call.1']
    #allocation4 [shape = 'u8[1024]{0}', space=vmem, size = 0x400, scoped, tag = 'output window, operand 1, single buffered']
    #allocation5 [shape = 's32[1]{0}', space=sflag, size = 0x4, scoped, tag = 'scoped memory for tpu_custom_call.1']
    %9 = vsyncpa [#allocation3], 0
    %10 = vsyncpa [#allocation5], 0
    // Predicated region
    $region2: #{tpu_custom_call.1} parent=1 // pred_check
      _
    $region3: #{tpu_custom_call.1} parent=1 // pred_check_branch
      %12 = sbr.rel (0) target = $region5
    $region4: #{tpu_custom_call.1} parent=1 // pred_region
      _
    $region5: #{tpu_custom_call.1} parent=1 // pred_fallthru
      _
    // Predicated region
    $region6: #{tpu_custom_call.1} parent=1 // pred_check
      _
    $region7: #{tpu_custom_call.1} parent=1 // pred_check_branch
      %14 = sbr.rel (0) target = $region9
    $region8: #{tpu_custom_call.1} parent=1 // pred_region
      _
    $region9: #{tpu_custom_call.1} parent=1 // pred_fallthru
      _
    %v15 = vld [vmem:[%s0] sm:$0xff]
    %v16 = vld [vmem:[%s0 + $0x8] sm:$0xff]
    %v17 = vld [vmem:[%s1] sm:$0xff]
    %v18 = vld [vmem:[%s1 + $0x8] sm:$0xff]
    %vm19 = vcmp.ne.s32.totalorder %v17, 0
    %vm20 = vcmp.ne.s32.totalorder %v18, 0
    %v21 = vand.u32 2147483647, %v15
    %v22 = vand.u32 2147483647, %v16
    %v23 = vsel %vm19, %v21, 0.0
    %v24 = vsel %vm20, %v22, 0.0
    %vm25 = vcmask 261120
    %v26 = vsel %vm25, %v23, 0.0
    %v27 = vrot.slane %v26, 4
    %v28 = vadd.f32 %v26, %v27
    %v29 = vrot.slane %v28, 2
    %v30 = vadd.f32 %v28, %v29
    %v31 = vrot.slane %v30, 1
    %v32 = vadd.f32 %v30, %v31
    %v33 = vsel %vm25, %v24, 0.0
    %v34 = vrot.slane %v33, 4
    %v35 = vadd.f32 %v33, %v34
    %v36 = vrot.slane %v35, 2
    %v37 = vadd.f32 %v35, %v36
    %v38 = vrot.slane %v37, 1
    %v39 = vadd.f32 %v37, %v38
    %v40 = vsel %vm19, 1.0, 0.0
    %v41 = vsel %vm20, 1.0, 0.0
    %v42 = vsel %vm25, %v40, 0.0
    %v43 = vrot.slane %v42, 4
    %v44 = vadd.f32 %v42, %v43
    %v45 = vrot.slane %v44, 2
    %v46 = vadd.f32 %v44, %v45
    %v47 = vrot.slane %v46, 1
    %v48 = vadd.f32 %v46, %v47
    %v49 = vsel %vm25, %v41, 0.0
    %v50 = vrot.slane %v49, 4
    %v51 = vadd.f32 %v49, %v50
    %v52 = vrot.slane %v51, 2
    %v53 = vadd.f32 %v51, %v52
    %v54 = vrot.slane %v53, 1
    %v55 = vadd.f32 %v53, %v54
    %v56 = vmax.f32 %v48, 1.0
    %v57 = vmax.f32 %v55, 1.0
    %v58 = vrcp.pop %v56
    %v59 = vmul.f32 %v32, %v58
    %v60 = vrcp.pop %v57
    %v61 = vmul.f32 %v39, %v60
    %vm62 = vcmp.gt.f32.partialorder %v48, 0.0
    %vm63 = vcmp.gt.f32.partialorder %v55, 0.0
    %v64 = vsel %vm62, %v59, 1.0
    %v65 = vsel %vm63, %v61, 1.0
    %v66 = vrcp.pop %v64
    %v67 = vrcp.pop %v65
    %vm70 = vcmask 1041409
    %v71 = vsel %vm70, %v65, %v64
    %vm73 = vcmask 254976
    %74 = vst.msk [vmem:[#allocation4] sm:$0x3] %vm73, %v71
    %v75 = vmul.f32 %v15, %v66
    %v76 = vmul.f32 %v16, %v67
    %77 = vst.msk [vmem:[#allocation2] sm:$0xff] %vm25, %v75
    %78 = vst.msk [vmem:[#allocation2 + $0x8] sm:$0xff] %vm25, %v76
    // Predicated region
    $region10: #{tpu_custom_call.1} parent=1 // pred_check
      _
    $region11: #{tpu_custom_call.1} parent=1 // pred_check_branch
      %80 = sbr.rel (0) target = $region13
    $region12: #{tpu_custom_call.1} parent=1 // pred_region
      %s82 = ssub.s32 256, 256
      %83 = vsyncadd [#allocation3], %s82
      %s84 = sshll.u32 [#allocation2], 4
      %s85 = int_to_ptr.vmem [resolvable:$true] %s84
      %90 = dma.vmem_to_hbm [thread:$0]  %s85, 256, %s2, [#allocation3], 128, 128, 8
    $region13: #{tpu_custom_call.1} parent=1 // pred_fallthru
      _
    // Predicated region
    $region14: #{tpu_custom_call.1} parent=1 // pred_check
      _
    $region15: #{tpu_custom_call.1} parent=1 // pred_check_branch
      %92 = sbr.rel (0) target = $region17
    $region16: #{tpu_custom_call.1} parent=1 // pred_region
      %s94 = ssub.s32 32, 32
      %95 = vsyncadd [#allocation5], %s94
      %s97 = sshll.u32 [#allocation4], 4
      %s98 = int_to_ptr.vmem [resolvable:$true] %s97
      %100 = dma.vmem_to_hbm [thread:$0]  %s98, 32, %s3, [#allocation5]
    $region17: #{tpu_custom_call.1} parent=1 // pred_fallthru
      _
    // Predicated region
    $region18: #{tpu_custom_call.1} parent=1 // pred_check
      _
    $region19: #{tpu_custom_call.1} parent=1 // pred_check_branch
      %102 = sbr.rel (0) target = $region21
    $region20: #{tpu_custom_call.1} parent=1 // pred_region
      %103 = dma.done [#allocation3], 256
    $region21: #{tpu_custom_call.1} parent=1 // pred_fallthru
      _
    // Predicated region
    $region22: #{tpu_custom_call.1} parent=1 // pred_check
      _
    $region23: #{tpu_custom_call.1} parent=1 // pred_check_branch
      %105 = sbr.rel (0) target = $region25
    $region24: #{tpu_custom_call.1} parent=1 // pred_region
      %106 = dma.done [#allocation5], 32
    $region25: #{tpu_custom_call.1} parent=1 // pred_fallthru
      _
    %107 = vsyncpa [#allocation3], 1
    %108 = vsyncpa [#allocation5], 1

</llo_original>
